<compile_context>
chip_gen: v6e
topology: v6e:2x2x1
jax: 0.10.0
libtpu: 0.0.40
codegen_flags: <defaults>
</compile_context>

<pallas_src>
import jax
import jax.numpy as jnp
from jax.experimental import pallas as pl
from jax.experimental.pallas import tpu as pltpu


def _round_up(x, m):
    return ((x + m - 1) // m) * m


def _largest_tile(n_pad, cap):
    """Largest multiple of 128 that divides n_pad and is <= cap."""
    best = 128
    t = 128
    while t <= min(cap, n_pad):
        if n_pad % t == 0:
            best = t
        t += 128
    return best


def _tpu_config():
    """(max_tile, vmem_limit_bytes, two_tensorcores) heuristic per generation."""
    try:
        vmem_cap = int(pltpu.get_tpu_info().vmem_capacity_bytes)
    except Exception:
        vmem_cap = 64 * 1024 * 1024  # conservative (v7x-like) fallback
    if vmem_cap >= 100 * 1024 * 1024:
        # v5e / v6e: 128 MiB VMEM, single TensorCore -> big tiles, high limit.
        return 1024, 96 * 1024 * 1024, False
    # v7x-like: 64 MiB VMEM per TC, 2 TensorCores -> 512 tiles, megacore care.
    return 512, 48 * 1024 * 1024, True


def _feature_transform_kernel(h_ref, w_ref, dis_ref, xw_ref):
    # (tm, D) @ (D, HFp) on the MXU, f32 accumulate; fold the column scale
    # d_j^{-1/2} into the xw rows; store in compute dtype.
    xw = jnp.dot(h_ref[...], w_ref[...], preferred_element_type=jnp.float32)
    xw_ref[...] = (xw * dis_ref[...]).astype(xw_ref.dtype)


def _make_aggregate_kernel(tk, xw_resident):
    def kernel(g_ref, xw_ref, dis_ref, b_ref, o_ref, acc_ref):
        k = pl.program_id(1)

        @pl.when(k == 0)
        def _init():
            acc_ref[...] = jnp.zeros_like(acc_ref)

        if xw_resident:
            # xw lives fully in VMEM (DMA'd once); slice the k-th row band.
            start = pl.multiple_of(k * tk, 128)
            xw_tile = xw_ref[pl.ds(start, tk), :]
        else:
            xw_tile = xw_ref[...]

        acc_ref[...] += jnp.dot(g_ref[...], xw_tile,
                                preferred_element_type=jnp.float32)

        @pl.when(k == pl.num_programs(1) - 1)
        def _finalize():
            # Row scale d_i^{-1/2} and bias only in the finalize branch;
            # lane-dense (multiple-of-128 wide) store.
            o_ref[...] = (acc_ref[...] * dis_ref[...]
                          + b_ref[...]).astype(o_ref.dtype)

    return kernel


def flattened_conv(adj, d_inv_sqrt, h, w, b, *, compute_dtype=jnp.bfloat16):
    """flatten_1( GraphConv(norm='both')(g, h) ) -> (N, heads*out_feats).

    adj:        (N, N) raw 0/1 adjacency with self-loops (graph structure);
                pass it already in `compute_dtype` to avoid any cast traffic
                (0/1 is exact in bf16).
    d_inv_sqrt: (N,) degree^{-1/2} (f32), applied in-kernel in f32.
    h: (N, D) features;  w: (D, heads*out_feats);  b: (heads*out_feats,)
    """
    n = adj.shape[0]
    d = h.shape[1]
    hf = w.shape[1]
    out_dtype = h.dtype
    cbytes = jnp.dtype(compute_dtype).itemsize
    out_bytes = jnp.dtype(out_dtype).itemsize

    hf_pad = _round_up(hf, 128)      # lane-dense output width
    n_pad = _round_up(n, 128)        # padding bounded to 128, not tile size

    max_tile, vmem_limit, two_tc = _tpu_config()
    tk = _largest_tile(n_pad, max_tile)   # reduction tile
    tm = tk                               # row tile
    if two_tc:
        # Megacore balance: prefer the largest row tile giving an even (>=2)
        # row-tile count so both TensorCores stay busy.
        t = tm
        while t >= 128:
            if n_pad % t == 0 and (n_pad // t) % 2 == 0:
                tm = t
                break
            t -= 128

    # ---- operand prep: never copy the NxN adjacency unless padding is
    #      genuinely required -----------------------------------------------
    if n_pad == n:
        gp = adj                     # passed straight through, native dtype
    else:
        gp = jnp.zeros((n_pad, n_pad), compute_dtype).at[:n, :n].set(
            adj.astype(compute_dtype))
    g_bytes = jnp.dtype(gp.dtype).itemsize

    if n_pad == n:
        hp = h.astype(compute_dtype)
    else:
        hp = jnp.zeros((n_pad, d), compute_dtype).at[:n, :].set(
            h.astype(compute_dtype))

    wp = jnp.zeros((d, hf_pad), compute_dtype).at[:, :hf].set(
        w.astype(compute_dtype))
    bp = jnp.zeros((1, hf_pad), jnp.float32).at[0, :hf].set(
        b.astype(jnp.float32))

    dis = d_inv_sqrt.astype(jnp.float32).reshape(n, 1)
    if n_pad != n:
        dis = jnp.zeros((n_pad, 1), jnp.float32).at[:n, :].set(dis)

    # ---- 1) feature transform: xw = (h @ W) * d^{-1/2}, computed once -----
    xw = pl.pallas_call(
        _feature_transform_kernel,
        out_shape=jax.ShapeDtypeStruct((n_pad, hf_pad), compute_dtype),
        grid=(n_pad // tm,),
        in_specs=[
            pl.BlockSpec((tm, d), lambda i: (i, 0)),
            pl.BlockSpec((d, hf_pad), lambda i: (0, 0)),
            pl.BlockSpec((tm, 1), lambda i: (i, 0)),
        ],
        out_specs=pl.BlockSpec((tm, hf_pad), lambda i: (i, 0)),
        compiler_params=pltpu.CompilerParams(
            dimension_semantics=("parallel",)),
        cost_estimate=pl.CostEstimate(
            flops=2 * n_pad * d * hf_pad,
            transcendentals=0,
            bytes_accessed=(n_pad * d + d * hf_pad + n_pad * hf_pad) * cbytes
                           + n_pad * 4),
    )(hp, wp, dis)

    # ---- 2) aggregation: out = d^{-1/2} * (A @ xw) + b ---------------------
    xw_resident = n_pad * hf_pad * cbytes <= 16 * 1024 * 1024
    if xw_resident:
        xw_spec = pl.BlockSpec((n_pad, hf_pad), lambda i, k: (0, 0))
        xw_traffic = n_pad * hf_pad * cbytes
    else:
        xw_spec = pl.BlockSpec((tk, hf_pad), lambda i, k: (k, 0))
        xw_traffic = (n_pad // tm) * n_pad * hf_pad * cbytes

    out_pad = pl.pallas_call(
        _make_aggregate_kernel(tk, xw_resident),
        out_shape=jax.ShapeDtypeStruct((n_pad, hf_pad), out_dtype),
        grid=(n_pad // tm, n_pad // tk),       # (row tiles, reduction tiles)
        in_specs=[
            pl.BlockSpec((tm, tk), lambda i, k: (i, k)),      # adjacency
            xw_spec,                                          # xw
            pl.BlockSpec((tm, 1), lambda i, k: (i, 0)),       # d^{-1/2} rows
            pl.BlockSpec((1, hf_pad), lambda i, k: (0, 0)),   # bias
        ],
        # Same output block across k -> accumulator stays resident.
        out_specs=pl.BlockSpec((tm, hf_pad), lambda i, k: (i, 0)),
        scratch_shapes=[pltpu.VMEM((tm, hf_pad), jnp.float32)],
        compiler_params=pltpu.CompilerParams(
            dimension_semantics=("parallel", "arbitrary"),
            vmem_limit_bytes=vmem_limit),
        cost_estimate=pl.CostEstimate(
            flops=2 * n_pad * n_pad * hf_pad,
            transcendentals=0,
            bytes_accessed=(n_pad * n_pad * g_bytes
                            + xw_traffic
                            + n_pad * 4
                            + n_pad * hf_pad * out_bytes)),
    )(gp, xw, dis, bp)

    return out_pad[:n, :hf]


if __name__ == "__main__":
    # N is a multiple of 128 so the NxN adjacency is handed to the kernel with
    # zero wrapper-side copies. D=32 in-feats, heads=2, out_feats=16
    # -> flattened output width 32.
    N, D, HEADS, OUT = 256, 32, 2, 16
    HF = HEADS * OUT

    key = jax.random.PRNGKey(0)
    k_adj, k_feat, k_w, k_b = jax.random.split(key, 4)

    # Random undirected 0/1 graph with self-loops (dgl graph + add_self_loop).
    logits = jax.random.uniform(k_adj, (N, N))
    adj_f32 = ((logits + logits.T) > 1.2).astype(jnp.float32)
    adj_f32 = jnp.maximum(adj_f32, jnp.eye(N, dtype=jnp.float32))
    deg = jnp.sum(adj_f32, axis=1)
    d_inv_sqrt = jax.lax.rsqrt(deg)

    # Store the adjacency in the compute dtype up front: 0/1 is exact in bf16
    # and the D^{-1/2} normalization is applied inside the kernels in f32.
    adj = adj_f32.astype(jnp.bfloat16)

    h = jax.random.normal(k_feat, (N, D), dtype=jnp.float32)
    # Heads folded into the last weight dim (Glorot-ish scale).
    w = jax.random.normal(k_w, (D, HF), dtype=jnp.float32) * (1.0 / jnp.sqrt(D))
    b = jax.random.normal(k_b, (HF,), dtype=jnp.float32) * 0.01

    out = flattened_conv(adj, d_inv_sqrt, h, w, b)
    out = jax.block_until_ready(out)

    # Pure-f32 reference of conv(g, h).flatten(1) (GraphConv, norm='both').
    g_norm = adj_f32 * d_inv_sqrt[:, None] * d_inv_sqrt[None, :]
    ref = g_norm @ (h @ w) + b.reshape(1, -1)

    assert out.shape == (N, HF), out.shape
    # bf16 features/weights with f32 accumulation -> loosened tolerance.
    max_err = float(jnp.max(jnp.abs(out - ref)))
    assert jnp.allclose(out, ref, atol=5e-2, rtol=5e-2), max_err
    print("KERNEL_OK")
</pallas_src>

<mosaic_0001>
module attributes {stable_mosaic.version = 11 : i64} {
  func.func @_feature_transform_kernel(%arg0: i32, %arg1: memref<128x32xbf16, #tpu.memory_space<vmem>>, %arg2: memref<32x128xbf16, #tpu.memory_space<vmem>>, %arg3: memref<128x1xf32, #tpu.memory_space<vmem>>, %arg4: memref<128x128xbf16, #tpu.memory_space<vmem>>) attributes {dimension_semantics = [#tpu.dimension_semantics<parallel>], iteration_bounds = array<i64: 2>, scalar_prefetch = 0 : i64, scratch_operands = 0 : i64, tpu.core_type = #tpu.core_type<tc>, window_params = [{transform_indices = @transform_0, window_bounds = array<i64: 128, 32>}, {pipeline_mode = #tpu.pipeline_mode<synchronous>, transform_indices = @transform_1, window_bounds = array<i64: 32, 128>}, {transform_indices = @transform_2, window_bounds = array<i64: 128, 1>}, {transform_indices = @transform_3, window_bounds = array<i64: 128, 128>}]} {
    %c0 = arith.constant 0 : index
    %c0_0 = arith.constant 0 : index
    %0 = vector.load %arg1[%c0, %c0_0] : memref<128x32xbf16, #tpu.memory_space<vmem>>, vector<128x32xbf16>
    %c0_1 = arith.constant 0 : index
    %c0_2 = arith.constant 0 : index
    %1 = vector.load %arg2[%c0_1, %c0_2] : memref<32x128xbf16, #tpu.memory_space<vmem>>, vector<32x128xbf16>
    %cst = arith.constant dense<0.000000e+00> : vector<128x128xf32>
    %2 = tpu.matmul %0, %1, %cst {dimension_numbers = #tpu.dot_dimension_numbers<[1], [0], [0], [1], [0, 0, 1, 1], [], []>} : vector<128x32xbf16>, vector<32x128xbf16>, vector<128x128xf32> -> vector<128x128xf32>
    %c0_3 = arith.constant 0 : index
    %c0_4 = arith.constant 0 : index
    %3 = vector.load %arg3[%c0_3, %c0_4] : memref<128x1xf32, #tpu.memory_space<vmem>>, vector<128x1xf32>
    %4 = vector.broadcast %3 : vector<128x1xf32> to vector<128x128xf32>
    %5 = arith.mulf %2, %4 : vector<128x128xf32>
    %6 = arith.truncf %5 : vector<128x128xf32> to vector<128x128xbf16>
    %c0_5 = arith.constant 0 : index
    %c0_6 = arith.constant 0 : index
    %7 = vector.load %arg4[%c0_5, %c0_6] : memref<128x128xbf16, #tpu.memory_space<vmem>>, vector<128x128xbf16>
    tpu.vector_store %arg4[%c0_5, %c0_6], %6 {strides = array<i32>} : memref<128x128xbf16, #tpu.memory_space<vmem>>, vector<128x128xbf16>,
    return
  }
  func.func @transform_0(%arg0: i32) -> (i32, i32) {
    %c0_i32 = arith.constant 0 : i32
    %c0_i32_0 = arith.constant 0 : i32
    return %arg0, %c0_i32 : i32, i32
  }
  func.func @transform_1(%arg0: i32) -> (i32, i32) {
    %c0_i32 = arith.constant 0 : i32
    %c0_i32_0 = arith.constant 0 : i32
    %c0_i32_1 = arith.constant 0 : i32
    return %c0_i32, %c0_i32_0 : i32, i32
  }
  func.func @transform_2(%arg0: i32) -> (i32, i32) {
    %c0_i32 = arith.constant 0 : i32
    %c0_i32_0 = arith.constant 0 : i32
    return %arg0, %c0_i32 : i32, i32
  }
  func.func @transform_3(%arg0: i32) -> (i32, i32) {
    %c0_i32 = arith.constant 0 : i32
    %c0_i32_0 = arith.constant 0 : i32
    return %arg0, %c0_i32 : i32, i32
  }
}

</mosaic_0001>

<llo_original>
// kernel: tpu_custom_call.1
$region0: #{tpu_custom_call.1}
  #allocation0 [shape = 'u32[]', space=smem, size = 0x4, offset = 0x4, fixed_abs, tag = 'smem constant byte address 0x4 - core index']
  #allocation1 [shape = 'u32[144,128]{1,0:T(1,128)}', space=vmem, size = 0x12000, scoped, tag = 'internal scratch']
  %s0 = inlined_call_operand.vmem [shape: bf16[256,32], index: 0, kind: input, shape index: {}]
  %s1 = inlined_call_operand.vmem [shape: bf16[32,128], index: 1, kind: input, shape index: {}]
  %s2 = inlined_call_operand.vmem [shape: f32[256,1], index: 2, kind: input, shape index: {}]
  %s3 = inlined_call_operand.hbm [shape: bf16[256,128], index: 3, kind: output, shape index: {}]
  %s4 = sld [smem:[#allocation0]]
  $region45: #{tpu_custom_call.1} parent=0
    _
  %s6 = ssub.s32 1, %s4
  %s7 = scalar_select 0, %s6, %s4
  $region1: #{tpu_custom_call.1} parent=0
    #allocation2 [shape = 'u8[65536]{0}', space=vmem, size = 0x10000, scoped, tag = 'output window, operand 0']
    #allocation3 [shape = 's32[2]{0}', space=sflag, size = 0x8, scoped, tag = 'scoped memory for tpu_custom_call.1']
    %8 = vsyncpa [#allocation3], 0
    %s9 = scalar_lea.sflag [#allocation3], 1
    %10 = vsyncpa %s9, 0
    loop: start=0, step=1, limit=4
    $region2: #{tpu_custom_call.1} parent=1 // loop_pre_header
      _
    $region3: #{tpu_custom_call.1} parent=1 // loop_header
      %s12 = sphi 0, %s16
      %p13 = scmp.ge.s32.totalorder %s12, 4
      %s22 = sphi 0, %s24
      %s25 = sphi 0, %s22
      %s26 = sphi 0, %s25
      %s42 = sphi 0, %s26
      %s46 = sphi 0, %s46
      %s48 = sphi 0, %s46
      %s49 = sphi 0, %s48
      %s63 = sphi 0, %s49
      %s69 = sphi 0, %s71
      %s72 = sphi 0, %s69
      %s73 = sphi 0, %s72
      %s89 = sphi 0, %s73
      %s95 = sphi 0, %s97
      %s98 = sphi 0, %s95
      %s99 = sphi 0, %s98
      %s115 = sphi 0, %s99
    $region4: #{tpu_custom_call.1} parent=1 // loop_header_branch
      %15 = sbr.rel (%p13) target = $region8
    $region5: #{tpu_custom_call.1} parent=1 // loop_body
      %s17 = ssub.s32 %s12, 1
      %s18 = ssub.s32 %s12, 2
      %s19 = sadd.s32 %s12, 1
      %s20 = ssub.s32 %s12, %s19
      %p21 = scmp.eq.s32.totalorder %s20, 0
      %s23 = sadd.s32 %s22, 1
      %s24 = scalar_select %p21, %s22, %s23
      %p27 = pneg %p21
      %p28 = scmp.eq.s32.totalorder %s12, 1
      %p29 = por %p27, %p28
      %p30 = scmp.ne.s32.totalorder %s22, %s25
      %p31 = scmp.eq.s32.totalorder %s12, 0
      %p32 = por %p30, %p31
      %p33 = scmp.ne.s32.totalorder %s22, %s25
      %p34 = scmp.eq.s32.totalorder %s17, 1
      %p35 = por %p33, %p34
      %p36 = scmp.ne.s32.totalorder %s25, %s26
      %p37 = scmp.eq.s32.totalorder %s17, 0
      %p38 = por %p36, %p37
      %p39 = scmp.ne.s32.totalorder %s25, %s26
      %p40 = scmp.eq.s32.totalorder %s18, 1
      %p41 = por %p39, %p40
      %p43 = scmp.ne.s32.totalorder %s26, %s42
      %p44 = scmp.eq.s32.totalorder %s18, 0
      %p45 = por %p43, %p44
      %s47 = sadd.s32 %s46, 1
      %p50 = scmp.eq.s32.totalorder %s12, 1
      %p51 = scmp.ne.s32.totalorder %s46, %s48
      %p52 = scmp.eq.s32.totalorder %s12, 0
      %p53 = por %p51, %p52
      %p54 = scmp.ne.s32.totalorder %s46, %s48
      %p55 = scmp.eq.s32.totalorder %s17, 1
      %p56 = por %p54, %p55
      %p57 = scmp.ne.s32.totalorder %s48, %s49
      %p58 = scmp.eq.s32.totalorder %s17, 0
      %p59 = por %p57, %p58
      %p60 = scmp.ne.s32.totalorder %s48, %s49
      %p61 = scmp.eq.s32.totalorder %s18, 1
      %p62 = por %p60, %p61
      %p64 = scmp.ne.s32.totalorder %s49, %s63
      %p65 = scmp.eq.s32.totalorder %s18, 0
      %p66 = por %p64, %p65
      %s67 = ssub.s32 %s12, %s19
      %p68 = scmp.eq.s32.totalorder %s67, 0
      %s70 = sadd.s32 %s69, 1
      %s71 = scalar_select %p68, %s69, %s70
      %p74 = pneg %p68
      %p75 = scmp.eq.s32.totalorder %s12, 1
      %p76 = por %p74, %p75
      %p77 = scmp.ne.s32.totalorder %s69, %s72
      %p78 = scmp.eq.s32.totalorder %s12, 0
      %p79 = por %p77, %p78
      %p80 = scmp.ne.s32.totalorder %s69, %s72
      %p81 = scmp.eq.s32.totalorder %s17, 1
      %p82 = por %p80, %p81
      %p83 = scmp.ne.s32.totalorder %s72, %s73
      %p84 = scmp.eq.s32.totalorder %s17, 0
      %p85 = por %p83, %p84
      %p86 = scmp.ne.s32.totalorder %s72, %s73
      %p87 = scmp.eq.s32.totalorder %s18, 1
      %p88 = por %p86, %p87
      %p90 = scmp.ne.s32.totalorder %s73, %s89
      %p91 = scmp.eq.s32.totalorder %s18, 0
      %p92 = por %p90, %p91
      %s93 = ssub.s32 %s12, %s19
      %p94 = scmp.eq.s32.totalorder %s93, 0
      %s96 = sadd.s32 %s95, 1
      %s97 = scalar_select %p94, %s95, %s96
      %p100 = pneg %p94
      %p101 = scmp.eq.s32.totalorder %s12, 1
      %p102 = por %p100, %p101
      %p103 = scmp.ne.s32.totalorder %s95, %s98
      %p104 = scmp.eq.s32.totalorder %s12, 0
      %p105 = por %p103, %p104
      %p106 = scmp.ne.s32.totalorder %s95, %s98
      %p107 = scmp.eq.s32.totalorder %s17, 1
      %p108 = por %p106, %p107
      %p109 = scmp.ne.s32.totalorder %s98, %s99
      %p110 = scmp.eq.s32.totalorder %s17, 0
      %p111 = por %p109, %p110
      %p112 = scmp.ne.s32.totalorder %s98, %s99
      %p113 = scmp.eq.s32.totalorder %s18, 1
      %p114 = por %p112, %p113
      %p116 = scmp.ne.s32.totalorder %s99, %s115
      %p117 = scmp.eq.s32.totalorder %s18, 0
      %p118 = por %p116, %p117
      %p119 = scmp.le.s32.totalorder 1, %s12
      %p120 = scmp.lt.s32.totalorder %s12, 3
      %p121 = pnand %p119, %p120
      %p122 = pneg %p121
      // Predicated region
      $region9: #{tpu_custom_call.1} parent=5 // pred_check
        _
      $region10: #{tpu_custom_call.1} parent=5 // pred_check_branch
        %124 = sbr.rel (%p121) target = $region12
      $region11: #{tpu_custom_call.1} parent=5 // pred_region
        %s125 = ssub.s32 %s12, 1
        // Predicated region
        $region13: #{tpu_custom_call.1} parent=11 // pred_check
          %p126 = pneg %p59
        $region14: #{tpu_custom_call.1} parent=11 // pred_check_branch
          %128 = sbr.rel (%p126) target = $region16
        $region15: #{tpu_custom_call.1} parent=11 // pred_region
          _
        $region16: #{tpu_custom_call.1} parent=11 // pred_fallthru
          _
      $region12: #{tpu_custom_call.1} parent=5 // pred_fallthru
        _
      %p129 = scmp.lt.s32.totalorder %s12, 2
      // Predicated region
      $region17: #{tpu_custom_call.1} parent=5 // pred_check
        %p130 = pneg %p129
      $region18: #{tpu_custom_call.1} parent=5 // pred_check_branch
        %132 = sbr.rel (%p130) target = $region20
      $region19: #{tpu_custom_call.1} parent=5 // pred_region
        // Predicated region
        $region21: #{tpu_custom_call.1} parent=19 // pred_check
          %p133 = pneg %p32
        $region22: #{tpu_custom_call.1} parent=19 // pred_check_branch
          %135 = sbr.rel (%p133) target = $region24
        $region23: #{tpu_custom_call.1} parent=19 // pred_region
          %s136 = smul.u32 16, %s12
          %p137 = scmp.lt.s32.totalorder %s136, 31
          %s138 = scalar_select %p137, %s136, 31
          %s139 = smul.addr %s138, 4
          %s140 = scalar_lea.vmem %s0, %s139
          %s141 = smul.u32 16, %s12
        $region24: #{tpu_custom_call.1} parent=19 // pred_fallthru
          _
        // Predicated region
        $region25: #{tpu_custom_call.1} parent=19 // pred_check
          %p142 = pneg %p79
        $region26: #{tpu_custom_call.1} parent=19 // pred_check_branch
          %144 = sbr.rel (%p142) target = $region28
        $region27: #{tpu_custom_call.1} parent=19 // pred_region
          %s145 = smul.u32 16, %s12
          %p146 = scmp.lt.s32.totalorder %s145, 31
          %s147 = scalar_select %p146, %s145, 31
          %s148 = smul.addr %s147, 8
          %s149 = scalar_lea.vmem %s2, %s148
          %s150 = smul.u32 16, %s12
        $region28: #{tpu_custom_call.1} parent=19 // pred_fallthru
          _
      $region20: #{tpu_custom_call.1} parent=5 // pred_fallthru
        _
      %p151 = scmp.le.s32.totalorder 1, %s12
      %p152 = scmp.lt.s32.totalorder %s12, 3
      %p153 = pnand %p151, %p152
      %p154 = pneg %p153
      // Predicated region
      $region29: #{tpu_custom_call.1} parent=5 // pred_check
        _
      $region30: #{tpu_custom_call.1} parent=5 // pred_check_branch
        %156 = sbr.rel (%p153) target = $region32
      $region31: #{tpu_custom_call.1} parent=5 // pred_region
        %s157 = ssub.s32 %s12, 1
        %s158 = smul.u32 16, %s17
        %p159 = scmp.lt.s32.totalorder %s158, 31
        %s160 = scalar_select %p159, %s158, 31
        %s161 = smul.addr %s160, 4
        %s162 = scalar_lea.vmem %s0, %s161
        %p163 = pneg %p38
        %p164 = pneg %p35
        %p165 = pneg %p59
        %p166 = pneg %p56
        %s167 = smul.u32 16, %s17
        %p168 = scmp.lt.s32.totalorder %s167, 31
        %s169 = scalar_select %p168, %s167, 31
        %s170 = smul.addr %s169, 8
        %s171 = scalar_lea.vmem %s2, %s170
        %p172 = pneg %p85
        %p173 = pneg %p82
        %p174 = pneg %p111
        %p175 = pneg %p108
        %s176 = sand.u32 %s98, 1
        %s177 = scalar_lea.sflag [#allocation3], %s176
        %s178 = sand.u32 %s98, 1
        %s179 = smul.addr %s178, 64
        %s180 = scalar_lea.vmem [#allocation2], %s179
        %s181 = smul.u32 16, %s17
        %p182 = scmp.lt.s32.totalorder %s181, 31
        %s183 = scalar_select %p182, %s181, 31
        %s184 = smul.addr %s183, 4
        %s185 = scalar_lea.vmem %s0, %s184
        %s186 = smul.u32 16, %s17
        %s187 = smul.u32 16, %s17
        %p188 = scmp.lt.s32.totalorder %s187, 31
        %s189 = scalar_select %p188, %s187, 31
        %s190 = smul.addr %s189, 8
        %s191 = scalar_lea.vmem %s2, %s190
        %s192 = smul.u32 16, %s17
        %s193 = smul.u32 16, %s17
        %v195 = vld [vmem:[%s185] sm:$0xf]
        %v196 = vld [vmem:[%s185 + $0x4] sm:$0xf]
        %v197 = vld [vmem:[%s185 + $0x8] sm:$0xf]
        %v198 = vld [vmem:[%s185 + $0xc] sm:$0xf]
        %v199 = vld [vmem:[%s185 + $0x10] sm:$0xf]
        %v200 = vld [vmem:[%s185 + $0x14] sm:$0xf]
        %v201 = vld [vmem:[%s185 + $0x18] sm:$0xf]
        %v202 = vld [vmem:[%s185 + $0x1c] sm:$0xf]
        %v203 = vld [vmem:[%s185 + $0x20] sm:$0xf]
        %v204 = vld [vmem:[%s185 + $0x24] sm:$0xf]
        %v205 = vld [vmem:[%s185 + $0x28] sm:$0xf]
        %v206 = vld [vmem:[%s185 + $0x2c] sm:$0xf]
        %v207 = vld [vmem:[%s185 + $0x30] sm:$0xf]
        %v208 = vld [vmem:[%s185 + $0x34] sm:$0xf]
        %v209 = vld [vmem:[%s185 + $0x38] sm:$0xf]
        %v210 = vld [vmem:[%s185 + $0x3c] sm:$0xf]
        %v211 = vld [vmem:[%s1] sm:$0xf]
        %v212 = vld [vmem:[%s1 + $0x4] sm:$0xf]
        %v213 = vld [vmem:[%s1 + $0x8] sm:$0xf]
        %v214 = vld [vmem:[%s1 + $0xc] sm:$0xf]
        %v231 = vunpack.c.l.b16 %v195
        %v232 = vunpack.c.l.b16 %v196
        %v233 = vunpack.c.l.b16 %v197
        %v234 = vunpack.c.l.b16 %v198
        %v235 = vunpack.c.l.b16 %v199
        %v236 = vunpack.c.l.b16 %v200
        %v237 = vunpack.c.l.b16 %v201
        %v238 = vunpack.c.l.b16 %v202
        %v239 = vunpack.c.l.b16 %v203
        %v240 = vunpack.c.l.b16 %v204
        %v241 = vunpack.c.l.b16 %v205
        %v242 = vunpack.c.l.b16 %v206
        %v243 = vunpack.c.l.b16 %v207
        %v244 = vunpack.c.l.b16 %v208
        %v245 = vunpack.c.l.b16 %v209
        %v246 = vunpack.c.l.b16 %v210
        %v247 = vpack.c.b16 %v232, %v231
        %v248 = vpack.c.b16 %v234, %v233
        %v249 = vpack.c.b16 %v236, %v235
        %v250 = vpack.c.b16 %v238, %v237
        %v251 = vpack.c.b16 %v240, %v239
        %v252 = vpack.c.b16 %v242, %v241
        %v253 = vpack.c.b16 %v244, %v243
        %v254 = vpack.c.b16 %v246, %v245
        %v259 = vunpack.c.l.b16 %v211
        %v260 = vunpack.c.l.b16 %v212
        %v261 = vunpack.c.l.b16 %v213
        %v262 = vunpack.c.l.b16 %v214
        %v263 = vpack.c.b16 %v260, %v259
        %v264 = vpack.c.b16 %v262, %v261
        %vm267 = vcmask 261120
        %v269 = vsel %vm267, %v247, 0
        %v272 = vsel %vm267, %v248, 0
        %v275 = vsel %vm267, %v249, 0
        %v278 = vsel %vm267, %v250, 0
        %v281 = vsel %vm267, %v251, 0
        %v284 = vsel %vm267, %v252, 0
        %v287 = vsel %vm267, %v253, 0
        %v290 = vsel %vm267, %v254, 0
        %292 = vmatprep.subr.bf16.mxu0 0
        %293 = vmatpush1.bf16.msra.mxu0 0
        %294 = vmatprep.subr.bf16.mxu0 0
        %295 = vmatpush1.bf16.msra.mxu0 0
        %296 = vmatprep.subr.bf16.mxu0 0
        %297 = vmatpush1.bf16.msra.mxu0 0
        %298 = vmatprep.subr.bf16.mxu0 0
        %299 = vmatpush1.bf16.msra.mxu0 0
        %300 = vmatprep.subr.bf16.mxu0 0
        %301 = vmatpush1.bf16.msra.mxu0 0
        %302 = vmatprep.subr.bf16.mxu0 0
        %303 = vmatpush1.bf16.msra.mxu0 0
        %304 = vmatprep.subr.bf16.mxu0 0
        %305 = vmatpush1.bf16.msra.mxu0 %v264
        %306 = vmatprep.subr.bf16.mxu0 0
        %307 = vmatpush1.bf16.msra.mxu0 %v263
        %308 = vmatprep.subr.bf16.mxu0 0
        %309 = vmatpush2.bf16.msra.mxu0 0
        %310 = vmatprep.subr.bf16.mxu0 0
        %311 = vmatpush2.bf16.msra.mxu0 0
        %312 = vmatprep.subr.bf16.mxu0 0
        %313 = vmatpush2.bf16.msra.mxu0 0
        %314 = vmatprep.subr.bf16.mxu0 0
        %315 = vmatpush2.bf16.msra.mxu0 0
        %316 = vmatprep.subr.bf16.mxu0 0
        %317 = vmatpush2.bf16.msra.mxu0 0
        %318 = vmatprep.subr.bf16.mxu0 0
        %319 = vmatpush2.bf16.msra.mxu0 0
        %320 = vmatprep.subr.bf16.mxu0 0
        %321 = vmatpush2.bf16.msra.mxu0 0
        %322 = vmatprep.subr.bf16.mxu0 0
        %323 = vmatpush2.bf16.msra.mxu0 0
        %324 = vmatprep.mubr.bf16.mxu0 0
        %325 = vmatmul.mubr.bf16.gmra.mxu0 %v269
        %v326 = vpop.f32.mrf.mxu0
        %v327 = vadd.f32 0.0, %v326
        %v328 = vpop.f32.mrf.mxu0
        %v329 = vpop.f32.mrf.mxu0
        %v330 = vadd.f32 0.0, %v329
        %v331 = vpop.f32.mrf.mxu0
        %332 = vmatprep.mubr.bf16.mxu0 0
        %333 = vmatmul.mubr.bf16.gmra.mxu0 %v272
        %v334 = vpop.f32.mrf.mxu0
        %v335 = vadd.f32 0.0, %v334
        %v336 = vpop.f32.mrf.mxu0
        %v337 = vpop.f32.mrf.mxu0
        %v338 = vadd.f32 0.0, %v337
        %v339 = vpop.f32.mrf.mxu0
        %340 = vmatprep.mubr.bf16.mxu0 0
        %341 = vmatmul.mubr.bf16.gmra.mxu0 %v275
        %v342 = vpop.f32.mrf.mxu0
        %v343 = vadd.f32 0.0, %v342
        %v344 = vpop.f32.mrf.mxu0
        %v345 = vpop.f32.mrf.mxu0
        %v346 = vadd.f32 0.0, %v345
        %v347 = vpop.f32.mrf.mxu0
        %348 = vmatprep.mubr.bf16.mxu0 0
        %349 = vmatmul.mubr.bf16.gmra.mxu0 %v278
        %v350 = vpop.f32.mrf.mxu0
        %v351 = vadd.f32 0.0, %v350
        %v352 = vpop.f32.mrf.mxu0
        %v353 = vpop.f32.mrf.mxu0
        %v354 = vadd.f32 0.0, %v353
        %v355 = vpop.f32.mrf.mxu0
        %356 = vmatprep.mubr.bf16.mxu0 0
        %357 = vmatmul.mubr.bf16.gmra.mxu0 %v281
        %v358 = vpop.f32.mrf.mxu0
        %v359 = vadd.f32 0.0, %v358
        %v360 = vpop.f32.mrf.mxu0
        %v361 = vpop.f32.mrf.mxu0
        %v362 = vadd.f32 0.0, %v361
        %v363 = vpop.f32.mrf.mxu0
        %364 = vmatprep.mubr.bf16.mxu0 0
        %365 = vmatmul.mubr.bf16.gmra.mxu0 %v284
        %v366 = vpop.f32.mrf.mxu0
        %v367 = vadd.f32 0.0, %v366
        %v368 = vpop.f32.mrf.mxu0
        %v369 = vpop.f32.mrf.mxu0
        %v370 = vadd.f32 0.0, %v369
        %v371 = vpop.f32.mrf.mxu0
        %372 = vmatprep.mubr.bf16.mxu0 0
        %373 = vmatmul.mubr.bf16.gmra.mxu0 %v287
        %v374 = vpop.f32.mrf.mxu0
        %v375 = vadd.f32 0.0, %v374
        %v376 = vpop.f32.mrf.mxu0
        %v377 = vpop.f32.mrf.mxu0
        %v378 = vadd.f32 0.0, %v377
        %v379 = vpop.f32.mrf.mxu0
        %380 = vmatprep.mubr.bf16.mxu0 0
        %381 = vmatmul.mubr.bf16.gmra.mxu0 %v290
        %v382 = vpop.f32.mrf.mxu0
        %v383 = vadd.f32 0.0, %v382
        %v384 = vpop.f32.mrf.mxu0
        %v385 = vpop.f32.mrf.mxu0
        %v386 = vadd.f32 0.0, %v385
        %v387 = vpop.f32.mrf.mxu0
        %388 = vdwg.mxu0
        %v389 = vld [vmem:[%s191] sm:$0xff]
        %v390 = vld [vmem:[%s191 + $0x8] sm:$0xff]
        %v391 = vld [vmem:[%s191 + $0x10] sm:$0xff]
        %v392 = vld [vmem:[%s191 + $0x18] sm:$0xff]
        %v393 = vld [vmem:[%s191 + $0x20] sm:$0xff]
        %v394 = vld [vmem:[%s191 + $0x28] sm:$0xff]
        %v395 = vld [vmem:[%s191 + $0x30] sm:$0xff]
        %v396 = vld [vmem:[%s191 + $0x38] sm:$0xff]
        %v397 = vld [vmem:[%s191 + $0x40] sm:$0xff]
        %v398 = vld [vmem:[%s191 + $0x48] sm:$0xff]
        %v399 = vld [vmem:[%s191 + $0x50] sm:$0xff]
        %v400 = vld [vmem:[%s191 + $0x58] sm:$0xff]
        %v401 = vld [vmem:[%s191 + $0x60] sm:$0xff]
        %v402 = vld [vmem:[%s191 + $0x68] sm:$0xff]
        %v403 = vld [vmem:[%s191 + $0x70] sm:$0xff]
        %v404 = vld [vmem:[%s191 + $0x78] sm:$0xff]
        %406 = vset.pattern.permute.xlu0 0
        %407 = vperm.xlu0 %406, %v389
        %v408 = vpop.permute.xlu0 %407
        %411 = vset.pattern.permute.xlu0 0
        %412 = vperm.xlu0 %411, %v390
        %v413 = vpop.permute.xlu0 %412
        %416 = vset.pattern.permute.xlu0 0
        %417 = vperm.xlu0 %416, %v391
        %v418 = vpop.permute.xlu0 %417
        %421 = vset.pattern.permute.xlu0 0
        %422 = vperm.xlu0 %421, %v392
        %v423 = vpop.permute.xlu0 %422
        %426 = vset.pattern.permute.xlu0 0
        %427 = vperm.xlu0 %426, %v393
        %v428 = vpop.permute.xlu0 %427
        %431 = vset.pattern.permute.xlu0 0
        %432 = vperm.xlu0 %431, %v394
        %v433 = vpop.permute.xlu0 %432
        %436 = vset.pattern.permute.xlu0 0
        %437 = vperm.xlu0 %436, %v395
        %v438 = vpop.permute.xlu0 %437
        %441 = vset.pattern.permute.xlu0 0
        %442 = vperm.xlu0 %441, %v396
        %v443 = vpop.permute.xlu0 %442
        %446 = vset.pattern.permute.xlu0 0
        %447 = vperm.xlu0 %446, %v397
        %v448 = vpop.permute.xlu0 %447
        %451 = vset.pattern.permute.xlu0 0
        %452 = vperm.xlu0 %451, %v398
        %v453 = vpop.permute.xlu0 %452
        %456 = vset.pattern.permute.xlu0 0
        %457 = vperm.xlu0 %456, %v399
        %v458 = vpop.permute.xlu0 %457
        %461 = vset.pattern.permute.xlu0 0
        %462 = vperm.xlu0 %461, %v400
        %v463 = vpop.permute.xlu0 %462
        %466 = vset.pattern.permute.xlu0 0
        %467 = vperm.xlu0 %466, %v401
        %v468 = vpop.permute.xlu0 %467
        %471 = vset.pattern.permute.xlu0 0
        %472 = vperm.xlu0 %471, %v402
        %v473 = vpop.permute.xlu0 %472
        %476 = vset.pattern.permute.xlu0 0
        %477 = vperm.xlu0 %476, %v403
        %v478 = vpop.permute.xlu0 %477
        %481 = vset.pattern.permute.xlu0 0
        %482 = vperm.xlu0 %481, %v404
        %v483 = vpop.permute.xlu0 %482
        %v485 = vmul.f32 %v327, %v408
        %v486 = vmul.f32 %v330, %v413
        %v487 = vmul.f32 %v335, %v418
        %v488 = vmul.f32 %v338, %v423
        %v489 = vmul.f32 %v343, %v428
        %v490 = vmul.f32 %v346, %v433
        %v491 = vmul.f32 %v351, %v438
        %v492 = vmul.f32 %v354, %v443
        %v493 = vmul.f32 %v359, %v448
        %v494 = vmul.f32 %v362, %v453
        %v495 = vmul.f32 %v367, %v458
        %v496 = vmul.f32 %v370, %v463
        %v497 = vmul.f32 %v375, %v468
        %v498 = vmul.f32 %v378, %v473
        %v499 = vmul.f32 %v383, %v478
        %v500 = vmul.f32 %v386, %v483
        %v501 = vpack.c.bf16 %v486, %v485
        %v502 = vpack.c.bf16 %v488, %v487
        %v503 = vpack.c.bf16 %v490, %v489
        %v504 = vpack.c.bf16 %v492, %v491
        %v505 = vpack.c.bf16 %v494, %v493
        %v506 = vpack.c.bf16 %v496, %v495
        %v507 = vpack.c.bf16 %v498, %v497
        %v508 = vpack.c.bf16 %v500, %v499
        %v517 = vunpack.c.l.b16 %v501
        %v518 = vunpack.c.h.b16 %v501
        %v519 = vunpack.c.l.b16 %v502
        %v520 = vunpack.c.h.b16 %v502
        %v521 = vunpack.c.l.b16 %v503
        %v522 = vunpack.c.h.b16 %v503
        %v523 = vunpack.c.l.b16 %v504
        %v524 = vunpack.c.h.b16 %v504
        %v525 = vunpack.c.l.b16 %v505
        %v526 = vunpack.c.h.b16 %v505
        %v527 = vunpack.c.l.b16 %v506
        %v528 = vunpack.c.h.b16 %v506
        %v529 = vunpack.c.l.b16 %v507
        %v530 = vunpack.c.h.b16 %v507
        %v531 = vunpack.c.l.b16 %v508
        %v532 = vunpack.c.h.b16 %v508
        %v533 = vpack.c.b16 %v517, %v517
        %v534 = vpack.c.b16 %v518, %v518
        %v535 = vpack.c.b16 %v519, %v519
        %v536 = vpack.c.b16 %v520, %v520
        %v537 = vpack.c.b16 %v521, %v521
        %v538 = vpack.c.b16 %v522, %v522
        %v539 = vpack.c.b16 %v523, %v523
        %v540 = vpack.c.b16 %v524, %v524
        %v541 = vpack.c.b16 %v525, %v525
        %v542 = vpack.c.b16 %v526, %v526
        %v543 = vpack.c.b16 %v527, %v527
        %v544 = vpack.c.b16 %v528, %v528
        %v545 = vpack.c.b16 %v529, %v529
        %v546 = vpack.c.b16 %v530, %v530
        %v547 = vpack.c.b16 %v531, %v531
        %v548 = vpack.c.b16 %v532, %v532
        %565 = vst [vmem:[%s180] sm:$0xf] %v533
        %566 = vst [vmem:[%s180 + $0x4] sm:$0xf] %v534
        %567 = vst [vmem:[%s180 + $0x8] sm:$0xf] %v535
        %568 = vst [vmem:[%s180 + $0xc] sm:$0xf] %v536
        %569 = vst [vmem:[%s180 + $0x10] sm:$0xf] %v537
        %570 = vst [vmem:[%s180 + $0x14] sm:$0xf] %v538
        %571 = vst [vmem:[%s180 + $0x18] sm:$0xf] %v539
        %572 = vst [vmem:[%s180 + $0x1c] sm:$0xf] %v540
        %573 = vst [vmem:[%s180 + $0x20] sm:$0xf] %v541
        %574 = vst [vmem:[%s180 + $0x24] sm:$0xf] %v542
        %575 = vst [vmem:[%s180 + $0x28] sm:$0xf] %v543
        %576 = vst [vmem:[%s180 + $0x2c] sm:$0xf] %v544
        %577 = vst [vmem:[%s180 + $0x30] sm:$0xf] %v545
        %578 = vst [vmem:[%s180 + $0x34] sm:$0xf] %v546
        %579 = vst [vmem:[%s180 + $0x38] sm:$0xf] %v547
        %580 = vst [vmem:[%s180 + $0x3c] sm:$0xf] %v548
        %s581 = sand.u32 %s98, 1
        %s582 = scalar_lea.sflag [#allocation3], %s581
        %s583 = sand.u32 %s98, 1
        %s584 = smul.addr %s583, 64
        %s585 = scalar_lea.vmem [#allocation2], %s584
        // Predicated region
        $region33: #{tpu_custom_call.1} parent=31 // pred_check
          %p586 = pneg %p108
        $region34: #{tpu_custom_call.1} parent=31 // pred_check_branch
          %588 = sbr.rel (%p586) target = $region36
        $region35: #{tpu_custom_call.1} parent=31 // pred_region
          %s589 = smul.u32 16, %s17
          %s591 = ssub.s32 1024, 1024
          %592 = vsyncadd %s582, %s591
          %s593 = smul.addr %s589, 64
          %s594 = scalar_lea.hbm %s3, %s593
          %s595 = sshll.u32 %s585, 4
          %s596 = int_to_ptr.vmem [resolvable:$true] %s595
          %601 = dma.vmem_to_hbm [thread:$0]  %s596, 1024, %s594, %s582, 64, 64, 4
        $region36: #{tpu_custom_call.1} parent=31 // pred_fallthru
          _
      $region32: #{tpu_custom_call.1} parent=5 // pred_fallthru
        _
      %p602 = scmp.le.s32.totalorder 2, %s12
      // Predicated region
      $region37: #{tpu_custom_call.1} parent=5 // pred_check
        %p603 = pneg %p602
      $region38: #{tpu_custom_call.1} parent=5 // pred_check_branch
        %605 = sbr.rel (%p603) target = $region40
      $region39: #{tpu_custom_call.1} parent=5 // pred_region
        %s606 = ssub.s32 %s12, 2
        // Predicated region
        $region41: #{tpu_custom_call.1} parent=39 // pred_check
          %p607 = pneg %p114
        $region42: #{tpu_custom_call.1} parent=39 // pred_check_branch
          %609 = sbr.rel (%p607) target = $region44
        $region43: #{tpu_custom_call.1} parent=39 // pred_region
          %s610 = sand.u32 %s99, 1
          %s611 = scalar_lea.sflag [#allocation3], %s610
          %s612 = sand.u32 %s99, 1
          %s613 = smul.addr %s612, 64
          %s614 = scalar_lea.vmem [#allocation2], %s613
          %615 = dma.done %s611, 1024
        $region44: #{tpu_custom_call.1} parent=39 // pred_fallthru
          _
      $region40: #{tpu_custom_call.1} parent=5 // pred_fallthru
        _
    $region6: #{tpu_custom_call.1} parent=1 // loop_footer
      %s16 = sadd.s32 1, %s12
    $region7: #{tpu_custom_call.1} parent=1 // loop_footer_branch
      %11 = sbr.rel target = $region3
    $region8: #{tpu_custom_call.1} parent=1 // loop_exit
      _
    %616 = vsyncpa [#allocation3], 1
    %s617 = scalar_lea.sflag [#allocation3], 1
    %618 = vsyncpa %s617, 1

</llo_original>
